<compile_context>
chip_gen: v6e
topology: v6e:2x2x1
jax: 0.10.0
libtpu: 0.0.40
codegen_flags: <defaults>
</compile_context>

<pallas_src>
import functools

import jax
import jax.numpy as jnp
from jax.experimental import pallas as pl
from jax.experimental.pallas import tpu as pltpu


def _round_up(a, m):
    return ((a + m - 1) // m) * m


def _pick_tb(b_padded, block_b):
    """Static (shape-time) batch-tile choice; b_padded and result are multiples of 8."""
    cap = max(8, (block_b // 8) * 8)
    if b_padded <= 256:
        # Small batch: a single tile; splitting only adds per-grid-step overhead.
        return min(cap, b_padded)
    # Large batch: at least 2 grid steps (v7x megacore sharding + DMA/compute overlap),
    # tiles >= 128 rows to amortize per-step overhead and feed the MXU M dimension.
    tb = max(128, _round_up(pl.cdiv(b_padded, 2), 8))
    return min(cap, tb)


def _residual_block_kernel(x_ref, w1t_ref, b1_ref, w2t_ref, b2_ref, o_ref):
    x = x_ref[...]                                            # (TB, F) f32

    # Linear 1 (weights pre-transposed at load time -> lane-dense MXU feed) + LeakyReLU(0.01)
    h = jnp.dot(x, w1t_ref[...], preferred_element_type=jnp.float32) + b1_ref[...]
    h = jnp.where(h > 0, h, 0.01 * h)

    # Linear 2 + bias + residual
    y = jnp.dot(h, w2t_ref[...], preferred_element_type=jnp.float32) + b2_ref[...] + x

    # tanh(softplus(y)) with PyTorch threshold=20:
    #   y <= 20: tanh(log1p(e^y)) == t*(t+2) / (t*(t+2) + 2),  t = e^y   (exact rewrite)
    #   y  > 20: softplus(y) = y and tanh(y) == 1.0 in f32
    # One EUP exp + one EUP approx reciprocal, refined with a single Newton step so the
    # result stays f32-accurate while avoiding the VPU divide sequence.
    t = jnp.exp(jnp.minimum(y, 20.0))
    num = t * (t + 2.0)
    den = num + 2.0
    inv = pl.reciprocal(den, approx=True)
    inv = inv * (2.0 - den * inv)                     # Newton-Raphson refinement
    o_ref[...] = jnp.where(y > 20.0, 1.0, num * inv)


def prepare_residual_block_params(w1, b1, w2, b2):
    """One-time weight prep (do at load time, NOT per call): transpose to W^T for a
    lane-dense MXU feed and zero-pad features to a multiple of 128 lanes. Zero rows/cols
    keep the matmuls and the residual add exact."""
    h_dim, d_dim = w1.shape
    assert d_dim == h_dim, "residual add requires input_dim == hidden_dim"
    f = _round_up(d_dim, 128)
    w1t = jnp.pad(jnp.asarray(w1, jnp.float32).T, ((0, f - d_dim), (0, f - h_dim)))
    w2t = jnp.pad(jnp.asarray(w2, jnp.float32).T, ((0, f - h_dim), (0, f - h_dim)))
    b1p = jnp.pad(jnp.asarray(b1, jnp.float32), (0, f - h_dim)).reshape(1, f)
    b2p = jnp.pad(jnp.asarray(b2, jnp.float32), (0, f - h_dim)).reshape(1, f)
    return w1t, b1p, w2t, b2p


@functools.partial(jax.jit, static_argnames=("block_b",))
def residual_block_apply(x, w1t, b1p, w2t, b2p, *, block_b=256):
    """Steady-state forward. x: (B, D) f32, params from prepare_residual_block_params.
    When D % 128 == 0 and B % 8 == 0 the call touches only x and out (no pad/slice ops)."""
    x = jnp.asarray(x, jnp.float32)
    B, D = x.shape
    F = w1t.shape[1]
    assert w1t.shape == (F, F) and w2t.shape == (F, F)
    assert b1p.shape == (1, F) and b2p.shape == (1, F)
    assert D <= F and F == _round_up(D, 128), "x width must match the prepared params"

    # Minimal padding: batch to a multiple of 8 (sublane alignment), features only when
    # D is not lane-aligned.  The ragged last batch tile is handled by Pallas masking.
    Bp = _round_up(B, 8)
    pad_b, pad_f = Bp - B, F - D
    x_in = jnp.pad(x, ((0, pad_b), (0, pad_f))) if (pad_b or pad_f) else x

    TB = _pick_tb(Bp, block_b)
    grid = (pl.cdiv(Bp, TB),)

    # Constant-index weight tiles: single-buffer once double-buffering two FxF f32 weights
    # starts to matter for VMEM (binding constraint on v7x's 64 MiB/TC).
    single_buffer_weights = F >= 512
    w_kw = {"pipeline_mode": pl.Buffered(1)} if single_buffer_weights else {}
    w_bufs = 1 if single_buffer_weights else 2

    # Explicit scoped-VMEM budget: weights + biases + double-buffered x/out tiles + headroom.
    # Never below 32 MiB (>= every generation's default scoped limit), capped at 64 MiB so
    # the request is valid on v7x as well as v5e/v6e.
    vmem_bytes = (2 * w_bufs * F * F * 4          # W1^T, W2^T
                  + 2 * 2 * 8 * F * 4             # biases (sublane-padded, double-buffered)
                  + 2 * 2 * TB * F * 4)           # x-in / out tiles, double-buffered
    vmem_limit = min(64 * 1024 * 1024,
                     max(32 * 1024 * 1024, int(1.5 * vmem_bytes) + (4 << 20)))

    rows = grid[0] * TB
    cost = pl.CostEstimate(
        flops=4 * rows * F * F + 10 * rows * F,   # two matmuls + elementwise
        transcendentals=2 * rows * F,             # exp + reciprocal per element
        bytes_accessed=4 * (2 * rows * F + 2 * F * F + 2 * F),
    )

    out_p = pl.pallas_call(
        _residual_block_kernel,
        out_shape=jax.ShapeDtypeStruct((Bp, F), jnp.float32),
        grid=grid,
        in_specs=[
            pl.BlockSpec((TB, F), lambda i: (i, 0)),          # x tile streams per grid step
            pl.BlockSpec((F, F), lambda i: (0, 0), **w_kw),   # W1^T: VMEM-resident
            pl.BlockSpec((1, F), lambda i: (0, 0), **w_kw),   # b1
            pl.BlockSpec((F, F), lambda i: (0, 0), **w_kw),   # W2^T: VMEM-resident
            pl.BlockSpec((1, F), lambda i: (0, 0), **w_kw),   # b2
        ],
        out_specs=pl.BlockSpec((TB, F), lambda i: (i, 0)),
        compiler_params=pltpu.CompilerParams(
            dimension_semantics=("parallel",),                # megacore sharding on v7x
            vmem_limit_bytes=vmem_limit,
        ),
        cost_estimate=cost,
    )(x_in, w1t, b1p, w2t, b2p)

    if pad_b or pad_f:
        return out_p[:B, :D]
    return out_p


def residual_block(x, w1, b1, w2, b2, *, block_b=256):
    """Convenience one-shot wrapper (re-preps weights each call; prefer prepare+apply)."""
    return residual_block_apply(x, *prepare_residual_block_params(w1, b1, w2, b2),
                                block_b=block_b)


def _reference(x, w1, b1, w2, b2, precision=None):
    dot = functools.partial(jnp.dot, precision=precision)
    h = dot(x, w1.T) + b1
    h = jnp.where(h > 0, h, 0.01 * h)
    y = dot(h, w2.T) + b2 + x
    sp = jnp.where(y > 20.0, y, jnp.log1p(jnp.exp(jnp.minimum(y, 20.0))))
    return jnp.tanh(sp)


def _check(out, x, w1, b1, w2, b2, tag):
    # XLA's default f32 matmul precision on TPU may use bf16 passes while the in-kernel
    # MXU f32 matmul is full precision (or the backend default may already be full f32),
    # so require 1e-5 agreement with at least one of the two reference precisions.
    ref_hi = _reference(x, w1, b1, w2, b2, precision=jax.lax.Precision.HIGHEST)
    ref_lo = _reference(x, w1, b1, w2, b2, precision=None)
    ok_hi = bool(jnp.allclose(out, ref_hi, atol=1e-5, rtol=1e-5))
    ok_lo = bool(jnp.allclose(out, ref_lo, atol=1e-5, rtol=1e-5))
    assert ok_hi or ok_lo, f"mismatch vs reference ({tag})"


if __name__ == "__main__":
    # Small, module-consistent shapes: batch=8, input_dim=hidden_dim=32.
    B, D, H = 8, 32, 32
    key = jax.random.PRNGKey(0)
    kx, k1, k2, k3, k4 = jax.random.split(key, 5)

    # Deterministic init mirroring nn.Linear's uniform(-1/sqrt(fan_in), 1/sqrt(fan_in)).
    bound1 = 1.0 / (D ** 0.5)
    bound2 = 1.0 / (H ** 0.5)
    x = jax.random.normal(kx, (B, D), dtype=jnp.float32)
    w1 = jax.random.uniform(k1, (H, D), minval=-bound1, maxval=bound1, dtype=jnp.float32)
    b1 = jax.random.uniform(k2, (H,), minval=-bound1, maxval=bound1, dtype=jnp.float32)
    w2 = jax.random.uniform(k3, (H, H), minval=-bound2, maxval=bound2, dtype=jnp.float32)
    b2 = jax.random.uniform(k4, (H,), minval=-bound2, maxval=bound2, dtype=jnp.float32)

    # One-time weight prep, hoisted out of the per-call path.
    params = prepare_residual_block_params(w1, b1, w2, b2)

    # 1) Small batch (single grid step).
    out = jax.block_until_ready(residual_block_apply(x, *params))
    assert out.shape == (B, H)
    _check(out, x, w1, b1, w2, b2, "small batch")

    # 2) Batch not a multiple of 8 (exercises the minimal batch pad + row slice).
    B2 = 5
    x2 = jax.random.normal(k1, (B2, D), dtype=jnp.float32)
    out2 = jax.block_until_ready(residual_block_apply(x2, *params))
    assert out2.shape == (B2, H)
    _check(out2, x2, w1, b1, w2, b2, "odd batch")

    # 3) Large batch: multi-step "parallel" grid with a ragged last tile
    #    (no padding of the batch up to a tile multiple).
    B3 = 520
    x3 = jax.random.normal(k2, (B3, D), dtype=jnp.float32)
    out3 = jax.block_until_ready(residual_block_apply(x3, *params))
    assert out3.shape == (B3, H)
    _check(out3, x3, w1, b1, w2, b2, "gridded batch")

    print("KERNEL_OK")
</pallas_src>

<mosaic_0001>
module attributes {stable_mosaic.version = 11 : i64} {
  func.func @_residual_block_kernel(%arg0: i32, %arg1: memref<8x128xf32, #tpu.memory_space<vmem>>, %arg2: memref<128x128xf32, #tpu.memory_space<vmem>>, %arg3: memref<1x128xf32, #tpu.memory_space<vmem>>, %arg4: memref<128x128xf32, #tpu.memory_space<vmem>>, %arg5: memref<1x128xf32, #tpu.memory_space<vmem>>, %arg6: memref<8x128xf32, #tpu.memory_space<vmem>>) attributes {dimension_semantics = [#tpu.dimension_semantics<parallel>], iteration_bounds = array<i64: 1>, scalar_prefetch = 0 : i64, scratch_operands = 0 : i64, tpu.core_type = #tpu.core_type<tc>, window_params = [{transform_indices = @transform_0, window_bounds = array<i64: 8, 128>}, {pipeline_mode = #tpu.pipeline_mode<synchronous>, transform_indices = @transform_1, window_bounds = array<i64: 128, 128>}, {pipeline_mode = #tpu.pipeline_mode<synchronous>, transform_indices = @transform_2, window_bounds = array<i64: 1, 128>}, {pipeline_mode = #tpu.pipeline_mode<synchronous>, transform_indices = @transform_3, window_bounds = array<i64: 128, 128>}, {pipeline_mode = #tpu.pipeline_mode<synchronous>, transform_indices = @transform_4, window_bounds = array<i64: 1, 128>}, {transform_indices = @transform_5, window_bounds = array<i64: 8, 128>}]} {
    %c0 = arith.constant 0 : index
    %c0_0 = arith.constant 0 : index
    %0 = vector.load %arg1[%c0, %c0_0] : memref<8x128xf32, #tpu.memory_space<vmem>>, vector<8x128xf32>
    %c0_1 = arith.constant 0 : index
    %c0_2 = arith.constant 0 : index
    %1 = vector.load %arg2[%c0_1, %c0_2] : memref<128x128xf32, #tpu.memory_space<vmem>>, vector<128x128xf32>
    %cst = arith.constant dense<0.000000e+00> : vector<8x128xf32>
    %2 = tpu.matmul %0, %1, %cst {dimension_numbers = #tpu.dot_dimension_numbers<[1], [0], [0], [1], [0, 0, 1, 1], [], []>} : vector<8x128xf32>, vector<128x128xf32>, vector<8x128xf32> -> vector<8x128xf32>
    %c0_3 = arith.constant 0 : index
    %c0_4 = arith.constant 0 : index
    %3 = vector.load %arg3[%c0_3, %c0_4] : memref<1x128xf32, #tpu.memory_space<vmem>>, vector<1x128xf32>
    %4 = vector.broadcast %3 : vector<1x128xf32> to vector<8x128xf32>
    %5 = arith.addf %2, %4 : vector<8x128xf32>
    %cst_5 = arith.constant 0.000000e+00 : f32
    %6 = vector.broadcast %cst_5 : f32 to vector<8x128xf32>
    %7 = arith.cmpf ogt, %5, %6 : vector<8x128xf32>
    %cst_6 = arith.constant 0.00999999977 : f32
    %8 = vector.broadcast %cst_6 : f32 to vector<8x128xf32>
    %9 = arith.mulf %8, %5 : vector<8x128xf32>
    %10 = arith.select %7, %5, %9 : vector<8x128xi1>, vector<8x128xf32>
    %c0_7 = arith.constant 0 : index
    %c0_8 = arith.constant 0 : index
    %11 = vector.load %arg4[%c0_7, %c0_8] : memref<128x128xf32, #tpu.memory_space<vmem>>, vector<128x128xf32>
    %cst_9 = arith.constant dense<0.000000e+00> : vector<8x128xf32>
    %12 = tpu.matmul %10, %11, %cst_9 {dimension_numbers = #tpu.dot_dimension_numbers<[1], [0], [0], [1], [0, 0, 1, 1], [], []>} : vector<8x128xf32>, vector<128x128xf32>, vector<8x128xf32> -> vector<8x128xf32>
    %c0_10 = arith.constant 0 : index
    %c0_11 = arith.constant 0 : index
    %13 = vector.load %arg5[%c0_10, %c0_11] : memref<1x128xf32, #tpu.memory_space<vmem>>, vector<1x128xf32>
    %14 = vector.broadcast %13 : vector<1x128xf32> to vector<8x128xf32>
    %15 = arith.addf %12, %14 : vector<8x128xf32>
    %16 = arith.addf %15, %0 : vector<8x128xf32>
    %cst_12 = arith.constant 2.000000e+01 : f32
    %17 = vector.broadcast %cst_12 : f32 to vector<8x128xf32>
    %18 = arith.minimumf %16, %17 : vector<8x128xf32>
    %19 = math.exp %18 : vector<8x128xf32>
    %cst_13 = arith.constant 2.000000e+00 : f32
    %20 = vector.broadcast %cst_13 : f32 to vector<8x128xf32>
    %21 = arith.addf %19, %20 : vector<8x128xf32>
    %22 = arith.mulf %19, %21 : vector<8x128xf32>
    %cst_14 = arith.constant 2.000000e+00 : f32
    %23 = vector.broadcast %cst_14 : f32 to vector<8x128xf32>
    %24 = arith.addf %22, %23 : vector<8x128xf32>
    %25 = tpu.reciprocal %24 {approx = true} : vector<8x128xf32> -> vector<8x128xf32>
    %26 = arith.mulf %24, %25 : vector<8x128xf32>
    %cst_15 = arith.constant 2.000000e+00 : f32
    %27 = vector.broadcast %cst_15 : f32 to vector<8x128xf32>
    %28 = arith.subf %27, %26 : vector<8x128xf32>
    %29 = arith.mulf %25, %28 : vector<8x128xf32>
    %cst_16 = arith.constant 2.000000e+01 : f32
    %30 = vector.broadcast %cst_16 : f32 to vector<8x128xf32>
    %31 = arith.cmpf ogt, %16, %30 : vector<8x128xf32>
    %32 = arith.mulf %22, %29 : vector<8x128xf32>
    %cst_17 = arith.constant 1.000000e+00 : f32
    %33 = vector.broadcast %cst_17 : f32 to vector<8x128xf32>
    %34 = arith.select %31, %33, %32 : vector<8x128xi1>, vector<8x128xf32>
    %c0_18 = arith.constant 0 : index
    %c0_19 = arith.constant 0 : index
    %35 = vector.load %arg6[%c0_18, %c0_19] : memref<8x128xf32, #tpu.memory_space<vmem>>, vector<8x128xf32>
    tpu.vector_store %arg6[%c0_18, %c0_19], %34 {strides = array<i32>} : memref<8x128xf32, #tpu.memory_space<vmem>>, vector<8x128xf32>,
    return
  }
  func.func @transform_0(%arg0: i32) -> (i32, i32) {
    %c0_i32 = arith.constant 0 : i32
    %c0_i32_0 = arith.constant 0 : i32
    return %arg0, %c0_i32 : i32, i32
  }
  func.func @transform_1(%arg0: i32) -> (i32, i32) {
    %c0_i32 = arith.constant 0 : i32
    %c0_i32_0 = arith.constant 0 : i32
    %c0_i32_1 = arith.constant 0 : i32
    return %c0_i32, %c0_i32_0 : i32, i32
  }
  func.func @transform_2(%arg0: i32) -> (i32, i32) {
    %c0_i32 = arith.constant 0 : i32
    %c0_i32_0 = arith.constant 0 : i32
    %c0_i32_1 = arith.constant 0 : i32
    return %c0_i32, %c0_i32_0 : i32, i32
  }
  func.func @transform_3(%arg0: i32) -> (i32, i32) {
    %c0_i32 = arith.constant 0 : i32
    %c0_i32_0 = arith.constant 0 : i32
    %c0_i32_1 = arith.constant 0 : i32
    return %c0_i32, %c0_i32_0 : i32, i32
  }
  func.func @transform_4(%arg0: i32) -> (i32, i32) {
    %c0_i32 = arith.constant 0 : i32
    %c0_i32_0 = arith.constant 0 : i32
    %c0_i32_1 = arith.constant 0 : i32
    return %c0_i32, %c0_i32_0 : i32, i32
  }
  func.func @transform_5(%arg0: i32) -> (i32, i32) {
    %c0_i32 = arith.constant 0 : i32
    %c0_i32_0 = arith.constant 0 : i32
    return %arg0, %c0_i32 : i32, i32
  }
}

</mosaic_0001>

<llo_original>
// kernel: residual_block_apply.1
$region0: #{residual_block_apply.1}
  #allocation0 [shape = 'u32[]', space=smem, size = 0x4, offset = 0x4, fixed_abs, tag = 'smem constant byte address 0x4 - core index']
  #allocation1 [shape = 'u32[144,128]{1,0:T(1,128)}', space=vmem, size = 0x12000, scoped, tag = 'internal scratch']
  %s0 = inlined_call_operand.vmem [shape: f32[8,128], index: 0, kind: input, shape index: {}]
  %s1 = inlined_call_operand.hbm [shape: f32[128,128], index: 1, kind: input, shape index: {}]
  %s2 = inlined_call_operand.vmem [shape: f32[1,128], index: 2, kind: input, shape index: {}]
  %s3 = inlined_call_operand.hbm [shape: f32[128,128], index: 3, kind: input, shape index: {}]
  %s4 = inlined_call_operand.vmem [shape: f32[1,128], index: 4, kind: input, shape index: {}]
  %s5 = inlined_call_operand.hbm [shape: f32[8,128], index: 5, kind: output, shape index: {}]
  %s6 = sld [smem:[#allocation0]]
  $region38: #{residual_block_apply.1} parent=0
    _
  %s8 = ssub.s32 1, %s6
  %s9 = scalar_select 0, %s8, %s6
  $region1: #{residual_block_apply.1} parent=0
    #allocation2 [shape = 'u8[65536]{0}', space=vmem, size = 0x10000, scoped, tag = 'input window, operand 1, single buffered']
    #allocation3 [shape = 's32[1]{0}', space=sflag, size = 0x4, scoped, tag = 'scoped memory for residual_block_apply.1']
    #allocation4 [shape = 's32[1]{0}', space=sflag, size = 0x4, scoped, tag = 'scoped memory for residual_block_apply.1']
    #allocation5 [shape = 'u8[65536]{0}', space=vmem, size = 0x10000, scoped, tag = 'input window, operand 3, single buffered']
    #allocation6 [shape = 's32[1]{0}', space=sflag, size = 0x4, scoped, tag = 'scoped memory for residual_block_apply.1']
    #allocation7 [shape = 'u8[4096]{0}', space=vmem, size = 0x1000, scoped, tag = 'output window, operand 0, single buffered']
    %10 = vsyncpa [#allocation3], 0
    %11 = vsyncpa [#allocation6], 0
    %12 = vsyncpa [#allocation4], 0
    // Predicated region
    $region2: #{residual_block_apply.1} parent=1 // pred_check
      _
    $region3: #{residual_block_apply.1} parent=1 // pred_check_branch
      %14 = sbr.rel (0) target = $region5
    $region4: #{residual_block_apply.1} parent=1 // pred_region
      _
    $region5: #{residual_block_apply.1} parent=1 // pred_fallthru
      _
    // Predicated region
    $region6: #{residual_block_apply.1} parent=1 // pred_check
      _
    $region7: #{residual_block_apply.1} parent=1 // pred_check_branch
      %16 = sbr.rel (0) target = $region9
    $region8: #{residual_block_apply.1} parent=1 // pred_region
      %s18 = ssub.s32 2048, 2048
      %19 = vsyncadd [#allocation3], %s18
      %s20 = sshll.u32 [#allocation2], 4
      %s21 = int_to_ptr.vmem [resolvable:$true] %s20
      %26 = dma.hbm_to_vmem [thread:$0]  %s1, 2048, %s21, [#allocation3], 128, 128, 8
    $region9: #{residual_block_apply.1} parent=1 // pred_fallthru
      _
    // Predicated region
    $region10: #{residual_block_apply.1} parent=1 // pred_check
      _
    $region11: #{residual_block_apply.1} parent=1 // pred_check_branch
      %28 = sbr.rel (0) target = $region13
    $region12: #{residual_block_apply.1} parent=1 // pred_region
      _
    $region13: #{residual_block_apply.1} parent=1 // pred_fallthru
      _
    // Predicated region
    $region14: #{residual_block_apply.1} parent=1 // pred_check
      _
    $region15: #{residual_block_apply.1} parent=1 // pred_check_branch
      %30 = sbr.rel (0) target = $region17
    $region16: #{residual_block_apply.1} parent=1 // pred_region
      %s32 = ssub.s32 2048, 2048
      %33 = vsyncadd [#allocation6], %s32
      %s34 = sshll.u32 [#allocation5], 4
      %s35 = int_to_ptr.vmem [resolvable:$true] %s34
      %40 = dma.hbm_to_vmem [thread:$0]  %s3, 2048, %s35, [#allocation6], 128, 128, 8
    $region17: #{residual_block_apply.1} parent=1 // pred_fallthru
      _
    // Predicated region
    $region18: #{residual_block_apply.1} parent=1 // pred_check
      _
    $region19: #{residual_block_apply.1} parent=1 // pred_check_branch
      %42 = sbr.rel (0) target = $region21
    $region20: #{residual_block_apply.1} parent=1 // pred_region
      _
    $region21: #{residual_block_apply.1} parent=1 // pred_fallthru
      _
    // Predicated region
    $region22: #{residual_block_apply.1} parent=1 // pred_check
      _
    $region23: #{residual_block_apply.1} parent=1 // pred_check_branch
      %44 = sbr.rel (0) target = $region25
    $region24: #{residual_block_apply.1} parent=1 // pred_region
      %45 = dma.done [#allocation3], 2048
    $region25: #{residual_block_apply.1} parent=1 // pred_fallthru
      _
    // Predicated region
    $region26: #{residual_block_apply.1} parent=1 // pred_check
      _
    $region27: #{residual_block_apply.1} parent=1 // pred_check_branch
      %47 = sbr.rel (0) target = $region29
    $region28: #{residual_block_apply.1} parent=1 // pred_region
      %48 = dma.done [#allocation6], 2048
    $region29: #{residual_block_apply.1} parent=1 // pred_fallthru
      _
    %v49 = vld [vmem:[%s0] sm:$0xff]
    %v50 = vld [vmem:[#allocation2] sm:$0xff]
    %v51 = vld [vmem:[#allocation2 + $0x8] sm:$0xff]
    %v52 = vld [vmem:[#allocation2 + $0x10] sm:$0xff]
    %v53 = vld [vmem:[#allocation2 + $0x18] sm:$0xff]
    %v54 = vld [vmem:[#allocation2 + $0x20] sm:$0xff]
    %v55 = vld [vmem:[#allocation2 + $0x28] sm:$0xff]
    %v56 = vld [vmem:[#allocation2 + $0x30] sm:$0xff]
    %v57 = vld [vmem:[#allocation2 + $0x38] sm:$0xff]
    %v58 = vld [vmem:[#allocation2 + $0x40] sm:$0xff]
    %v59 = vld [vmem:[#allocation2 + $0x48] sm:$0xff]
    %v60 = vld [vmem:[#allocation2 + $0x50] sm:$0xff]
    %v61 = vld [vmem:[#allocation2 + $0x58] sm:$0xff]
    %v62 = vld [vmem:[#allocation2 + $0x60] sm:$0xff]
    %v63 = vld [vmem:[#allocation2 + $0x68] sm:$0xff]
    %v64 = vld [vmem:[#allocation2 + $0x70] sm:$0xff]
    %v65 = vld [vmem:[#allocation2 + $0x78] sm:$0xff]
    %v66 = vld [vmem:[%s2] sm:$0x1]
    %v68 = vlaneseq
    %v69 = vshrl.u32 %v68, 7
    %v70 = vsub.s32 0, %v69
    %v71 = vrot.slane %v66, %v70
    %73 = vmatprep.subr.mxu0 0.0
    %74 = vmatpush1.msra.mxu0 %v65
    %75 = vmatprep.subr.mxu0 0.0
    %76 = vmatpush1.msra.mxu0 %v64
    %77 = vmatprep.subr.mxu0 0.0
    %78 = vmatpush1.msra.mxu0 %v63
    %79 = vmatprep.subr.mxu0 0.0
    %80 = vmatpush1.msra.mxu0 %v62
    %81 = vmatprep.subr.mxu0 0.0
    %82 = vmatpush1.msra.mxu0 %v61
    %83 = vmatprep.subr.mxu0 0.0
    %84 = vmatpush1.msra.mxu0 %v60
    %85 = vmatprep.subr.mxu0 0.0
    %86 = vmatpush1.msra.mxu0 %v59
    %87 = vmatprep.subr.mxu0 0.0
    %88 = vmatpush1.msra.mxu0 %v58
    %89 = vmatprep.subr.mxu0 0.0
    %90 = vmatpush1.msra.mxu0 %v57
    %91 = vmatprep.subr.mxu0 0.0
    %92 = vmatpush1.msra.mxu0 %v56
    %93 = vmatprep.subr.mxu0 0.0
    %94 = vmatpush1.msra.mxu0 %v55
    %95 = vmatprep.subr.mxu0 0.0
    %96 = vmatpush1.msra.mxu0 %v54
    %97 = vmatprep.subr.mxu0 0.0
    %98 = vmatpush1.msra.mxu0 %v53
    %99 = vmatprep.subr.mxu0 0.0
    %100 = vmatpush1.msra.mxu0 %v52
    %101 = vmatprep.subr.mxu0 0.0
    %102 = vmatpush1.msra.mxu0 %v51
    %103 = vmatprep.subr.mxu0 0.0
    %104 = vmatpush1.msra.mxu0 %v50
    %105 = vmatprep.subr.mxu0 0.0
    %106 = vmatpush2.msra.mxu0 0.0
    %107 = vmatprep.subr.mxu0 0.0
    %108 = vmatpush2.msra.mxu0 0.0
    %109 = vmatprep.subr.mxu0 0.0
    %110 = vmatpush2.msra.mxu0 0.0
    %111 = vmatprep.subr.mxu0 0.0
    %112 = vmatpush2.msra.mxu0 0.0
    %113 = vmatprep.subr.mxu0 0.0
    %114 = vmatpush2.msra.mxu0 0.0
    %115 = vmatprep.subr.mxu0 0.0
    %116 = vmatpush2.msra.mxu0 0.0
    %117 = vmatprep.subr.mxu0 0.0
    %118 = vmatpush2.msra.mxu0 0.0
    %119 = vmatprep.subr.mxu0 0.0
    %120 = vmatpush2.msra.mxu0 0.0
    %121 = vmatprep.subr.mxu0 0.0
    %122 = vmatpush2.msra.mxu0 0.0
    %123 = vmatprep.subr.mxu0 0.0
    %124 = vmatpush2.msra.mxu0 0.0
    %125 = vmatprep.subr.mxu0 0.0
    %126 = vmatpush2.msra.mxu0 0.0
    %127 = vmatprep.subr.mxu0 0.0
    %128 = vmatpush2.msra.mxu0 0.0
    %129 = vmatprep.subr.mxu0 0.0
    %130 = vmatpush2.msra.mxu0 0.0
    %131 = vmatprep.subr.mxu0 0.0
    %132 = vmatpush2.msra.mxu0 0.0
    %133 = vmatprep.subr.mxu0 0.0
    %134 = vmatpush2.msra.mxu0 0.0
    %135 = vmatprep.subr.mxu0 0.0
    %136 = vmatpush2.msra.mxu0 0.0
    %137 = vmatprep.mubr.f32.mxu0 0.0
    %138 = vmatmul.mubr.f32.gmra.mxu0 %v49
    %v139 = vpop.f32.mrf.mxu0
    %v140 = vadd.f32 %v71, %v139
    %v141 = vpop.f32.mrf.mxu0
    %142 = vdwg.mxu0
    %vm143 = vcmp.gt.f32.partialorder %v140, 0.0
    %v144 = vmul.f32 %v140, 0.01
    %v145 = vsel %vm143, %v140, %v144
    %v146 = vld [vmem:[#allocation5] sm:$0xff]
    %v147 = vld [vmem:[#allocation5 + $0x8] sm:$0xff]
    %v148 = vld [vmem:[#allocation5 + $0x10] sm:$0xff]
    %v149 = vld [vmem:[#allocation5 + $0x18] sm:$0xff]
    %v150 = vld [vmem:[#allocation5 + $0x20] sm:$0xff]
    %v151 = vld [vmem:[#allocation5 + $0x28] sm:$0xff]
    %v152 = vld [vmem:[#allocation5 + $0x30] sm:$0xff]
    %v153 = vld [vmem:[#allocation5 + $0x38] sm:$0xff]
    %v154 = vld [vmem:[#allocation5 + $0x40] sm:$0xff]
    %v155 = vld [vmem:[#allocation5 + $0x48] sm:$0xff]
    %v156 = vld [vmem:[#allocation5 + $0x50] sm:$0xff]
    %v157 = vld [vmem:[#allocation5 + $0x58] sm:$0xff]
    %v158 = vld [vmem:[#allocation5 + $0x60] sm:$0xff]
    %v159 = vld [vmem:[#allocation5 + $0x68] sm:$0xff]
    %v160 = vld [vmem:[#allocation5 + $0x70] sm:$0xff]
    %v161 = vld [vmem:[#allocation5 + $0x78] sm:$0xff]
    %v162 = vld [vmem:[%s4] sm:$0x1]
    %v164 = vlaneseq
    %v165 = vshrl.u32 %v164, 7
    %v166 = vsub.s32 0, %v165
    %v167 = vrot.slane %v162, %v166
    %169 = vmatprep.subr.mxu0 0.0
    %170 = vmatpush1.msra.mxu0 %v161
    %171 = vmatprep.subr.mxu0 0.0
    %172 = vmatpush1.msra.mxu0 %v160
    %173 = vmatprep.subr.mxu0 0.0
    %174 = vmatpush1.msra.mxu0 %v159
    %175 = vmatprep.subr.mxu0 0.0
    %176 = vmatpush1.msra.mxu0 %v158
    %177 = vmatprep.subr.mxu0 0.0
    %178 = vmatpush1.msra.mxu0 %v157
    %179 = vmatprep.subr.mxu0 0.0
    %180 = vmatpush1.msra.mxu0 %v156
    %181 = vmatprep.subr.mxu0 0.0
    %182 = vmatpush1.msra.mxu0 %v155
    %183 = vmatprep.subr.mxu0 0.0
    %184 = vmatpush1.msra.mxu0 %v154
    %185 = vmatprep.subr.mxu0 0.0
    %186 = vmatpush1.msra.mxu0 %v153
    %187 = vmatprep.subr.mxu0 0.0
    %188 = vmatpush1.msra.mxu0 %v152
    %189 = vmatprep.subr.mxu0 0.0
    %190 = vmatpush1.msra.mxu0 %v151
    %191 = vmatprep.subr.mxu0 0.0
    %192 = vmatpush1.msra.mxu0 %v150
    %193 = vmatprep.subr.mxu0 0.0
    %194 = vmatpush1.msra.mxu0 %v149
    %195 = vmatprep.subr.mxu0 0.0
    %196 = vmatpush1.msra.mxu0 %v148
    %197 = vmatprep.subr.mxu0 0.0
    %198 = vmatpush1.msra.mxu0 %v147
    %199 = vmatprep.subr.mxu0 0.0
    %200 = vmatpush1.msra.mxu0 %v146
    %201 = vmatprep.subr.mxu0 0.0
    %202 = vmatpush2.msra.mxu0 0.0
    %203 = vmatprep.subr.mxu0 0.0
    %204 = vmatpush2.msra.mxu0 0.0
    %205 = vmatprep.subr.mxu0 0.0
    %206 = vmatpush2.msra.mxu0 0.0
    %207 = vmatprep.subr.mxu0 0.0
    %208 = vmatpush2.msra.mxu0 0.0
    %209 = vmatprep.subr.mxu0 0.0
    %210 = vmatpush2.msra.mxu0 0.0
    %211 = vmatprep.subr.mxu0 0.0
    %212 = vmatpush2.msra.mxu0 0.0
    %213 = vmatprep.subr.mxu0 0.0
    %214 = vmatpush2.msra.mxu0 0.0
    %215 = vmatprep.subr.mxu0 0.0
    %216 = vmatpush2.msra.mxu0 0.0
    %217 = vmatprep.subr.mxu0 0.0
    %218 = vmatpush2.msra.mxu0 0.0
    %219 = vmatprep.subr.mxu0 0.0
    %220 = vmatpush2.msra.mxu0 0.0
    %221 = vmatprep.subr.mxu0 0.0
    %222 = vmatpush2.msra.mxu0 0.0
    %223 = vmatprep.subr.mxu0 0.0
    %224 = vmatpush2.msra.mxu0 0.0
    %225 = vmatprep.subr.mxu0 0.0
    %226 = vmatpush2.msra.mxu0 0.0
    %227 = vmatprep.subr.mxu0 0.0
    %228 = vmatpush2.msra.mxu0 0.0
    %229 = vmatprep.subr.mxu0 0.0
    %230 = vmatpush2.msra.mxu0 0.0
    %231 = vmatprep.subr.mxu0 0.0
    %232 = vmatpush2.msra.mxu0 0.0
    %233 = vmatprep.mubr.f32.mxu0 0.0
    %234 = vmatmul.mubr.f32.gmra.mxu0 %v145
    %v235 = vpop.f32.mrf.mxu0
    %v236 = vadd.f32 %v167, %v235
    %v237 = vpop.f32.mrf.mxu0
    %238 = vdwg.mxu0
    %v239 = vadd.f32 %v236, %v49
    %v240 = vmin.f32 %v239, 20.0
    %v241 = vmul.f32 %v240, 1.442695
    %v242 = vpow.pop %v241
    %v243 = vadd.f32 %v242, 2.0
    %v244 = vmul.f32 %v242, %v243
    %v245 = vadd.f32 %v244, 2.0
    %v246 = vrcp.pop %v245
    %v247 = vmul.f32 %v245, %v246
    %v248 = vsub.f32 2.0, %v247
    %v249 = vmul.f32 %v246, %v248
    %vm250 = vcmp.gt.f32.partialorder %v239, 20.0
    %v251 = vmul.f32 %v244, %v249
    %v252 = vsel %vm250, 1.0, %v251
    %253 = vst [vmem:[#allocation7] sm:$0xff] %v252
    // Predicated region
    $region30: #{residual_block_apply.1} parent=1 // pred_check
      _
    $region31: #{residual_block_apply.1} parent=1 // pred_check_branch
      %255 = sbr.rel (0) target = $region33
    $region32: #{residual_block_apply.1} parent=1 // pred_region
      %s257 = ssub.s32 128, 128
      %258 = vsyncadd [#allocation4], %s257
      %s260 = sshll.u32 [#allocation7], 4
      %s261 = int_to_ptr.vmem [resolvable:$true] %s260
      %263 = dma.vmem_to_hbm [thread:$0]  %s261, 128, %s5, [#allocation4]
    $region33: #{residual_block_apply.1} parent=1 // pred_fallthru
      _
    // Predicated region
    $region34: #{residual_block_apply.1} parent=1 // pred_check
      _
    $region35: #{residual_block_apply.1} parent=1 // pred_check_branch
      %265 = sbr.rel (0) target = $region37
    $region36: #{residual_block_apply.1} parent=1 // pred_region
      %266 = dma.done [#allocation4], 128
    $region37: #{residual_block_apply.1} parent=1 // pred_fallthru
      _
    %267 = vsyncpa [#allocation3], 1
    %268 = vsyncpa [#allocation6], 1
    %269 = vsyncpa [#allocation4], 1

</llo_original>
